<compile_context>
chip_gen: v7x
topology: tpu7x:2x2x1
jax: 0.10.0
libtpu: 0.0.40
codegen_flags: <defaults>
</compile_context>

<pallas_src>
import functools

import jax
import jax.numpy as jnp
from jax.experimental import pallas as pl
from jax.experimental.pallas import tpu as pltpu


def _round_up(n, m):
    return ((n + m - 1) // m) * m


def _pad2d(a, rows, cols):
    r, c = a.shape
    return jnp.pad(a, ((0, rows - r), (0, cols - c)))


def _generator_kernel(x_ref,
                      w1_ref, b1_ref,
                      w2_ref, b2_ref,
                      w3_ref, b3_ref,
                      w4_ref, b4_ref,
                      o_ref):
    """Fused 4-layer MLP on one batch tile: (linear+leaky_relu)x3, linear+tanh.

    Dropout(p=0.3) is the identity at inference time, so it is a no-op here.
    Matmul inputs are bf16, accumulation and elementwise math are f32; the
    final tanh is computed in f32 and stored bf16.
    """
    # TODO(synk): training-mode dropout would need pltpu.prng_seed /
    # pltpu.stateful_bernoulli; inference semantics (identity) used here.

    def leaky_relu(h):
        # max(h, 0.2*h) == leaky_relu(h, 0.2) for slope < 1.
        return jnp.maximum(h, 0.2 * h)

    h = jnp.dot(x_ref[...], w1_ref[...],
                preferred_element_type=jnp.float32) + b1_ref[...]
    h = leaky_relu(h).astype(jnp.bfloat16)

    h = jnp.dot(h, w2_ref[...],
                preferred_element_type=jnp.float32) + b2_ref[...]
    h = leaky_relu(h).astype(jnp.bfloat16)

    h = jnp.dot(h, w3_ref[...],
                preferred_element_type=jnp.float32) + b3_ref[...]
    h = leaky_relu(h).astype(jnp.bfloat16)

    h = jnp.dot(h, w4_ref[...],
                preferred_element_type=jnp.float32) + b4_ref[...]
    o_ref[...] = jnp.tanh(h).astype(o_ref.dtype)


def prepare_params(params):
    """One-time prep: pad every feature dim to a multiple of 128 and cast
    weights to bf16 (biases stay f32). Zero pads are exact for this network
    (padded weight rows / bias lanes are 0 -> padded activations stay 0).

    params: dict with w1..w4 stored (in, out) and b1..b4 stored (1, out), f32.
    Returns a dict of arrays only (jit/pytree friendly).
    """
    dims = [params["w1"].shape[0]] + [params[f"w{i}"].shape[1]
                                      for i in range(1, 5)]
    pdims = [_round_up(d, 128) for d in dims]
    prepped = {}
    for i in range(1, 5):
        prepped[f"w{i}"] = _pad2d(params[f"w{i}"], pdims[i - 1], pdims[i]
                                  ).astype(jnp.bfloat16)
        prepped[f"b{i}"] = _pad2d(params[f"b{i}"], 1, pdims[i]
                                  ).astype(jnp.float32)
    return prepped


def generator_forward(latent_v, prepped, *, out_dim, tile_b=None):
    """JAX wrapper mirroring G.forward.

    latent_v: any array whose elements reshape to (-1, 100).
    prepped:  output of prepare_params (padded bf16 weights, f32 biases).
    out_dim:  true (unpadded) output width of fc4.
    Returns (batch, out_dim) bf16.
    """
    x = jnp.reshape(latent_v, (-1, 100)).astype(jnp.float32)
    batch, in_dim = x.shape

    # Padded layer widths, recovered from the prepared weights.
    pdims = [prepped["w1"].shape[0]] + [prepped[f"w{i}"].shape[1]
                                        for i in range(1, 5)]
    assert pdims[0] == _round_up(in_dim, 128)

    # Batch tiling: stream x/out tiles, keep weights VMEM-resident.
    # Target large tiles (amortize ~0.35 us/step), but keep >= 2 grid steps for
    # large batches so v7x megacore can split the "parallel" axis and the
    # pipeline still overlaps DMA with compute.
    if tile_b is None:
        target = 2048
        half = _round_up(pl.cdiv(batch, 2), 8)
        tile_b = max(8, min(target, half))
    batch_pad = _round_up(batch, tile_b)
    grid = (batch_pad // tile_b,)

    # Per-call prep touches only x.
    xp = _pad2d(x, batch_pad, pdims[0]).astype(jnp.bfloat16)

    ws = [prepped[f"w{i}"] for i in range(1, 5)]
    bs = [prepped[f"b{i}"] for i in range(1, 5)]
    operands = (xp,
                ws[0], bs[0], ws[1], bs[1], ws[2], bs[2], ws[3], bs[3])

    def _const_spec(shape):
        # Weights / biases: same full-array block every grid step; the constant
        # index_map keeps them VMEM-resident (no re-DMA per step).
        return pl.BlockSpec(shape, lambda i: (0, 0))

    in_specs = [pl.BlockSpec((tile_b, pdims[0]), lambda i: (i, 0))]
    for w, b in zip(ws, bs):
        in_specs.append(_const_spec(w.shape))
        in_specs.append(_const_spec(b.shape))

    out_specs = pl.BlockSpec((tile_b, pdims[4]), lambda i: (i, 0))

    flops = 2 * batch_pad * sum(pdims[i] * pdims[i + 1] for i in range(4))
    bytes_accessed = (
        xp.size * xp.dtype.itemsize
        + sum(w.size * w.dtype.itemsize for w in ws)
        + sum(b.size * b.dtype.itemsize for b in bs)
        + batch_pad * pdims[4] * 2)  # bf16 output
    cost = pl.CostEstimate(flops=flops,
                           transcendentals=batch_pad * pdims[4],
                           bytes_accessed=bytes_accessed)

    # Scoped-VMEM guard: only override the default (32 MiB) when a large
    # user-supplied tile would need it; clamp to v7x's 64 MiB physical VMEM.
    vmem_est = (
        2 * tile_b * pdims[0] * 2          # x, double-buffered, bf16
        + 2 * tile_b * pdims[4] * 2        # out, double-buffered, bf16
        + 2 * sum(w.size * 2 for w in ws)  # weights bf16 (buffered)
        + 2 * sum(b.size * 4 for b in bs)  # biases f32 (buffered)
        + 6 * tile_b * max(pdims) * 4)     # headroom for f32 intermediates
    cp_kwargs = dict(dimension_semantics=("parallel",))
    if vmem_est > (32 << 20):
        cp_kwargs["vmem_limit_bytes"] = int(min(vmem_est, 64 << 20))

    out_padded = pl.pallas_call(
        _generator_kernel,
        out_shape=jax.ShapeDtypeStruct((batch_pad, pdims[4]), jnp.bfloat16),
        grid_spec=pltpu.PrefetchScalarGridSpec(
            num_scalar_prefetch=0,
            grid=grid,
            in_specs=in_specs,
            out_specs=out_specs,
        ),
        compiler_params=pltpu.CompilerParams(**cp_kwargs),
        cost_estimate=cost,
    )(*operands)

    # Slice stays inside the same jit as the kernel so XLA fuses it with the
    # surrounding program instead of doing a separate HBM pass.
    return out_padded[:batch, :out_dim]


def init_params(key, input_l, output_l_g, hidden_dim):
    """Deterministic PyTorch-style init: U(-1/sqrt(fan_in), 1/sqrt(fan_in))."""
    dims = [input_l, hidden_dim * 2, hidden_dim * 4, hidden_dim * 2, output_l_g]
    params = {}
    for idx in range(4):
        fan_in, fan_out = dims[idx], dims[idx + 1]
        key, kw, kb = jax.random.split(key, 3)
        bound = 1.0 / jnp.sqrt(jnp.float32(fan_in))
        # stored (in, out) — transposed relative to nn.Linear.weight (out, in)
        params[f"w{idx + 1}"] = jax.random.uniform(
            kw, (fan_in, fan_out), jnp.float32, -bound, bound)
        params[f"b{idx + 1}"] = jax.random.uniform(
            kb, (1, fan_out), jnp.float32, -bound, bound)
    return params


def reference_forward(latent_v, params):
    """Pure-JAX reference matching the kernel's numerics (bf16 dot, f32 acc)."""
    x = jnp.reshape(latent_v, (-1, 100)).astype(jnp.float32)
    for i in range(1, 5):
        w = params[f"w{i}"].astype(jnp.bfloat16)
        h = jnp.dot(x.astype(jnp.bfloat16), w,
                    preferred_element_type=jnp.float32) + params[f"b{i}"]
        if i < 4:
            x = jnp.maximum(h, 0.2 * h)
        else:
            x = jnp.tanh(h)
    return x


if __name__ == "__main__":
    # Small shapes consistent with the forward: input_l must be 100
    # (forced by x.view(-1, 100)); hidden_dim=32; output_l_g=64.
    input_l = 100
    hidden_dim = 32
    output_l_g = 64

    key = jax.random.PRNGKey(0)
    key, k_in, k_in2 = jax.random.split(key, 3)
    params = init_params(key, input_l, output_l_g, hidden_dim)
    prepped = prepare_params(params)

    fwd = jax.jit(functools.partial(generator_forward, out_dim=output_l_g))

    # Case 1: tiny batch (single grid step).
    batch = 2
    latent_v = jax.random.normal(k_in, (batch, input_l), jnp.float32)
    out = jax.block_until_ready(fwd(latent_v, prepped))
    ref = reference_forward(latent_v, params)
    assert out.shape == (batch, output_l_g), out.shape
    assert out.dtype == jnp.bfloat16, out.dtype
    assert jnp.allclose(out.astype(jnp.float32), ref, atol=1e-2, rtol=1e-2), \
        "mismatch vs reference (batch=2)"

    # Case 2: non-multiple batch exercising the 2-step grid + padding path.
    batch2 = 300
    latent_v2 = jax.random.normal(k_in2, (batch2, input_l), jnp.float32)
    out2 = jax.block_until_ready(fwd(latent_v2, prepped))
    ref2 = reference_forward(latent_v2, params)
    assert out2.shape == (batch2, output_l_g), out2.shape
    assert jnp.allclose(out2.astype(jnp.float32), ref2, atol=1e-2, rtol=1e-2), \
        "mismatch vs reference (batch=300)"

    print("KERNEL_OK")
</pallas_src>

<mosaic_0001>
module attributes {stable_mosaic.version = 11 : i64} {
  func.func @_generator_kernel(%arg0: i32, %arg1: memref<8x128xbf16, #tpu.memory_space<vmem>>, %arg2: memref<128x128xbf16, #tpu.memory_space<vmem>>, %arg3: memref<1x128xf32, #tpu.memory_space<vmem>>, %arg4: memref<128x128xbf16, #tpu.memory_space<vmem>>, %arg5: memref<1x128xf32, #tpu.memory_space<vmem>>, %arg6: memref<128x128xbf16, #tpu.memory_space<vmem>>, %arg7: memref<1x128xf32, #tpu.memory_space<vmem>>, %arg8: memref<128x128xbf16, #tpu.memory_space<vmem>>, %arg9: memref<1x128xf32, #tpu.memory_space<vmem>>, %arg10: memref<8x128xbf16, #tpu.memory_space<vmem>>) attributes {dimension_semantics = [#tpu.dimension_semantics<parallel>], iteration_bounds = array<i64: 1>, scalar_prefetch = 0 : i64, scratch_operands = 0 : i64, tpu.core_type = #tpu.core_type<tc>, window_params = [{transform_indices = @transform_0, window_bounds = array<i64: 8, 128>}, {pipeline_mode = #tpu.pipeline_mode<synchronous>, transform_indices = @transform_1, window_bounds = array<i64: 128, 128>}, {pipeline_mode = #tpu.pipeline_mode<synchronous>, transform_indices = @transform_2, window_bounds = array<i64: 1, 128>}, {pipeline_mode = #tpu.pipeline_mode<synchronous>, transform_indices = @transform_3, window_bounds = array<i64: 128, 128>}, {pipeline_mode = #tpu.pipeline_mode<synchronous>, transform_indices = @transform_4, window_bounds = array<i64: 1, 128>}, {pipeline_mode = #tpu.pipeline_mode<synchronous>, transform_indices = @transform_5, window_bounds = array<i64: 128, 128>}, {pipeline_mode = #tpu.pipeline_mode<synchronous>, transform_indices = @transform_6, window_bounds = array<i64: 1, 128>}, {pipeline_mode = #tpu.pipeline_mode<synchronous>, transform_indices = @transform_7, window_bounds = array<i64: 128, 128>}, {pipeline_mode = #tpu.pipeline_mode<synchronous>, transform_indices = @transform_8, window_bounds = array<i64: 1, 128>}, {transform_indices = @transform_9, window_bounds = array<i64: 8, 128>}]} {
    %c0 = arith.constant 0 : index
    %c0_0 = arith.constant 0 : index
    %0 = vector.load %arg1[%c0, %c0_0] : memref<8x128xbf16, #tpu.memory_space<vmem>>, vector<8x128xbf16>
    %c0_1 = arith.constant 0 : index
    %c0_2 = arith.constant 0 : index
    %1 = vector.load %arg2[%c0_1, %c0_2] : memref<128x128xbf16, #tpu.memory_space<vmem>>, vector<128x128xbf16>
    %cst = arith.constant dense<0.000000e+00> : vector<8x128xf32>
    %2 = tpu.matmul %0, %1, %cst {dimension_numbers = #tpu.dot_dimension_numbers<[1], [0], [0], [1], [0, 0, 1, 1], [], []>} : vector<8x128xbf16>, vector<128x128xbf16>, vector<8x128xf32> -> vector<8x128xf32>
    %c0_3 = arith.constant 0 : index
    %c0_4 = arith.constant 0 : index
    %3 = vector.load %arg3[%c0_3, %c0_4] : memref<1x128xf32, #tpu.memory_space<vmem>>, vector<1x128xf32>
    %4 = vector.broadcast %3 : vector<1x128xf32> to vector<8x128xf32>
    %5 = arith.addf %2, %4 : vector<8x128xf32>
    %cst_5 = arith.constant 2.000000e-01 : f32
    %6 = vector.broadcast %cst_5 : f32 to vector<8x128xf32>
    %7 = arith.mulf %6, %5 : vector<8x128xf32>
    %8 = arith.maximumf %5, %7 : vector<8x128xf32>
    %9 = arith.truncf %8 : vector<8x128xf32> to vector<8x128xbf16>
    %c0_6 = arith.constant 0 : index
    %c0_7 = arith.constant 0 : index
    %10 = vector.load %arg4[%c0_6, %c0_7] : memref<128x128xbf16, #tpu.memory_space<vmem>>, vector<128x128xbf16>
    %cst_8 = arith.constant dense<0.000000e+00> : vector<8x128xf32>
    %11 = tpu.matmul %9, %10, %cst_8 {dimension_numbers = #tpu.dot_dimension_numbers<[1], [0], [0], [1], [0, 0, 1, 1], [], []>} : vector<8x128xbf16>, vector<128x128xbf16>, vector<8x128xf32> -> vector<8x128xf32>
    %c0_9 = arith.constant 0 : index
    %c0_10 = arith.constant 0 : index
    %12 = vector.load %arg5[%c0_9, %c0_10] : memref<1x128xf32, #tpu.memory_space<vmem>>, vector<1x128xf32>
    %13 = vector.broadcast %12 : vector<1x128xf32> to vector<8x128xf32>
    %14 = arith.addf %11, %13 : vector<8x128xf32>
    %cst_11 = arith.constant 2.000000e-01 : f32
    %15 = vector.broadcast %cst_11 : f32 to vector<8x128xf32>
    %16 = arith.mulf %15, %14 : vector<8x128xf32>
    %17 = arith.maximumf %14, %16 : vector<8x128xf32>
    %18 = arith.truncf %17 : vector<8x128xf32> to vector<8x128xbf16>
    %c0_12 = arith.constant 0 : index
    %c0_13 = arith.constant 0 : index
    %19 = vector.load %arg6[%c0_12, %c0_13] : memref<128x128xbf16, #tpu.memory_space<vmem>>, vector<128x128xbf16>
    %cst_14 = arith.constant dense<0.000000e+00> : vector<8x128xf32>
    %20 = tpu.matmul %18, %19, %cst_14 {dimension_numbers = #tpu.dot_dimension_numbers<[1], [0], [0], [1], [0, 0, 1, 1], [], []>} : vector<8x128xbf16>, vector<128x128xbf16>, vector<8x128xf32> -> vector<8x128xf32>
    %c0_15 = arith.constant 0 : index
    %c0_16 = arith.constant 0 : index
    %21 = vector.load %arg7[%c0_15, %c0_16] : memref<1x128xf32, #tpu.memory_space<vmem>>, vector<1x128xf32>
    %22 = vector.broadcast %21 : vector<1x128xf32> to vector<8x128xf32>
    %23 = arith.addf %20, %22 : vector<8x128xf32>
    %cst_17 = arith.constant 2.000000e-01 : f32
    %24 = vector.broadcast %cst_17 : f32 to vector<8x128xf32>
    %25 = arith.mulf %24, %23 : vector<8x128xf32>
    %26 = arith.maximumf %23, %25 : vector<8x128xf32>
    %27 = arith.truncf %26 : vector<8x128xf32> to vector<8x128xbf16>
    %c0_18 = arith.constant 0 : index
    %c0_19 = arith.constant 0 : index
    %28 = vector.load %arg8[%c0_18, %c0_19] : memref<128x128xbf16, #tpu.memory_space<vmem>>, vector<128x128xbf16>
    %cst_20 = arith.constant dense<0.000000e+00> : vector<8x128xf32>
    %29 = tpu.matmul %27, %28, %cst_20 {dimension_numbers = #tpu.dot_dimension_numbers<[1], [0], [0], [1], [0, 0, 1, 1], [], []>} : vector<8x128xbf16>, vector<128x128xbf16>, vector<8x128xf32> -> vector<8x128xf32>
    %c0_21 = arith.constant 0 : index
    %c0_22 = arith.constant 0 : index
    %30 = vector.load %arg9[%c0_21, %c0_22] : memref<1x128xf32, #tpu.memory_space<vmem>>, vector<1x128xf32>
    %31 = vector.broadcast %30 : vector<1x128xf32> to vector<8x128xf32>
    %32 = arith.addf %29, %31 : vector<8x128xf32>
    %33 = math.tanh %32 : vector<8x128xf32>
    %34 = arith.truncf %33 : vector<8x128xf32> to vector<8x128xbf16>
    %c0_23 = arith.constant 0 : index
    %c0_24 = arith.constant 0 : index
    %35 = vector.load %arg10[%c0_23, %c0_24] : memref<8x128xbf16, #tpu.memory_space<vmem>>, vector<8x128xbf16>
    tpu.vector_store %arg10[%c0_23, %c0_24], %34 {strides = array<i32>} : memref<8x128xbf16, #tpu.memory_space<vmem>>, vector<8x128xbf16>,
    return
  }
  func.func @transform_0(%arg0: i32) -> (i32, i32) {
    %c0_i32 = arith.constant 0 : i32
    %c0_i32_0 = arith.constant 0 : i32
    return %arg0, %c0_i32 : i32, i32
  }
  func.func @transform_1(%arg0: i32) -> (i32, i32) {
    %c0_i32 = arith.constant 0 : i32
    %c0_i32_0 = arith.constant 0 : i32
    %c0_i32_1 = arith.constant 0 : i32
    return %c0_i32, %c0_i32_0 : i32, i32
  }
  func.func @transform_2(%arg0: i32) -> (i32, i32) {
    %c0_i32 = arith.constant 0 : i32
    %c0_i32_0 = arith.constant 0 : i32
    %c0_i32_1 = arith.constant 0 : i32
    return %c0_i32, %c0_i32_0 : i32, i32
  }
  func.func @transform_3(%arg0: i32) -> (i32, i32) {
    %c0_i32 = arith.constant 0 : i32
    %c0_i32_0 = arith.constant 0 : i32
    %c0_i32_1 = arith.constant 0 : i32
    return %c0_i32, %c0_i32_0 : i32, i32
  }
  func.func @transform_4(%arg0: i32) -> (i32, i32) {
    %c0_i32 = arith.constant 0 : i32
    %c0_i32_0 = arith.constant 0 : i32
    %c0_i32_1 = arith.constant 0 : i32
    return %c0_i32, %c0_i32_0 : i32, i32
  }
  func.func @transform_5(%arg0: i32) -> (i32, i32) {
    %c0_i32 = arith.constant 0 : i32
    %c0_i32_0 = arith.constant 0 : i32
    %c0_i32_1 = arith.constant 0 : i32
    return %c0_i32, %c0_i32_0 : i32, i32
  }
  func.func @transform_6(%arg0: i32) -> (i32, i32) {
    %c0_i32 = arith.constant 0 : i32
    %c0_i32_0 = arith.constant 0 : i32
    %c0_i32_1 = arith.constant 0 : i32
    return %c0_i32, %c0_i32_0 : i32, i32
  }
  func.func @transform_7(%arg0: i32) -> (i32, i32) {
    %c0_i32 = arith.constant 0 : i32
    %c0_i32_0 = arith.constant 0 : i32
    %c0_i32_1 = arith.constant 0 : i32
    return %c0_i32, %c0_i32_0 : i32, i32
  }
  func.func @transform_8(%arg0: i32) -> (i32, i32) {
    %c0_i32 = arith.constant 0 : i32
    %c0_i32_0 = arith.constant 0 : i32
    %c0_i32_1 = arith.constant 0 : i32
    return %c0_i32, %c0_i32_0 : i32, i32
  }
  func.func @transform_9(%arg0: i32) -> (i32, i32) {
    %c0_i32 = arith.constant 0 : i32
    %c0_i32_0 = arith.constant 0 : i32
    return %arg0, %c0_i32 : i32, i32
  }
}

</mosaic_0001>

<llo_original>
// kernel: generator_forward.1
$region0: #{generator_forward.1}
  #allocation0 [shape = 'u32[]', space=smem, size = 0x4, offset = 0x4, fixed_abs, tag = 'smem constant byte address 0x4 - core index']
  #allocation1 [shape = 'u32[144,128]{1,0:T(1,128)}', space=vmem, size = 0x12000, scoped, tag = 'internal scratch']
  %s0 = inlined_call_operand.vmem [shape: bf16[8,128], index: 0, kind: input, shape index: {}]
  %s1 = inlined_call_operand.hbm [shape: bf16[128,128], index: 1, kind: input, shape index: {}]
  %s2 = inlined_call_operand.vmem [shape: f32[1,128], index: 2, kind: input, shape index: {}]
  %s3 = inlined_call_operand.hbm [shape: bf16[128,128], index: 3, kind: input, shape index: {}]
  %s4 = inlined_call_operand.vmem [shape: f32[1,128], index: 4, kind: input, shape index: {}]
  %s5 = inlined_call_operand.hbm [shape: bf16[128,128], index: 5, kind: input, shape index: {}]
  %s6 = inlined_call_operand.vmem [shape: f32[1,128], index: 6, kind: input, shape index: {}]
  %s7 = inlined_call_operand.hbm [shape: bf16[128,128], index: 7, kind: input, shape index: {}]
  %s8 = inlined_call_operand.vmem [shape: f32[1,128], index: 8, kind: input, shape index: {}]
  %s9 = inlined_call_operand.vmem [shape: bf16[8,128], index: 9, kind: output, shape index: {}]
  %s10 = sld [smem:[#allocation0]]
  $region62: #{generator_forward.1} parent=0
    _
  %s12 = ssub.s32 1, %s10
  %s13 = scalar_select 0, %s12, %s10
  $region1: #{generator_forward.1} parent=0
    #allocation2 [shape = 'u8[32768]{0}', space=vmem, size = 0x8000, scoped, tag = 'input window, operand 1, single buffered']
    #allocation3 [shape = 's32[1]{0}', space=sflag, size = 0x4, scoped, tag = 'scoped memory for generator_forward.1']
    #allocation4 [shape = 'u8[32768]{0}', space=vmem, size = 0x8000, scoped, tag = 'input window, operand 3, single buffered']
    #allocation5 [shape = 's32[1]{0}', space=sflag, size = 0x4, scoped, tag = 'scoped memory for generator_forward.1']
    #allocation6 [shape = 'u8[32768]{0}', space=vmem, size = 0x8000, scoped, tag = 'input window, operand 5, single buffered']
    #allocation7 [shape = 'u8[32768]{0}', space=vmem, size = 0x8000, scoped, tag = 'input window, operand 7, single buffered']
    #allocation8 [shape = 's32[1]{0}', space=sflag, size = 0x4, scoped, tag = 'scoped memory for generator_forward.1']
    %14 = vsyncpa [#allocation3], 0
    %15 = vsyncpa [#allocation5], 0
    %16 = vsyncpa [#allocation8], 0
    // Predicated region
    $region2: #{generator_forward.1} parent=1 // pred_check
      _
    $region3: #{generator_forward.1} parent=1 // pred_check_branch
      %18 = sbr.rel (0) target = $region5
    $region4: #{generator_forward.1} parent=1 // pred_region
      _
    $region5: #{generator_forward.1} parent=1 // pred_fallthru
      _
    // Predicated region
    $region6: #{generator_forward.1} parent=1 // pred_check
      _
    $region7: #{generator_forward.1} parent=1 // pred_check_branch
      %20 = sbr.rel (0) target = $region9
    $region8: #{generator_forward.1} parent=1 // pred_region
      %s22 = ssub.s32 1024, 1024
      %23 = vsyncadd [#allocation3], %s22
      %s24 = sshll.u32 [#allocation2], 4
      %s25 = int_to_ptr.vmem [resolvable:$true] %s24
      %30 = dma.hbm_to_vmem [thread:$0]  %s1, 1024, %s25, [#allocation3], 64, 64, 4
    $region9: #{generator_forward.1} parent=1 // pred_fallthru
      _
    // Predicated region
    $region10: #{generator_forward.1} parent=1 // pred_check
      _
    $region11: #{generator_forward.1} parent=1 // pred_check_branch
      %32 = sbr.rel (0) target = $region13
    $region12: #{generator_forward.1} parent=1 // pred_region
      _
    $region13: #{generator_forward.1} parent=1 // pred_fallthru
      _
    // Predicated region
    $region14: #{generator_forward.1} parent=1 // pred_check
      _
    $region15: #{generator_forward.1} parent=1 // pred_check_branch
      %34 = sbr.rel (0) target = $region17
    $region16: #{generator_forward.1} parent=1 // pred_region
      %s36 = ssub.s32 1024, 1024
      %37 = vsyncadd [#allocation5], %s36
      %s38 = sshll.u32 [#allocation4], 4
      %s39 = int_to_ptr.vmem [resolvable:$true] %s38
      %44 = dma.hbm_to_vmem [thread:$0]  %s3, 1024, %s39, [#allocation5], 64, 64, 4
    $region17: #{generator_forward.1} parent=1 // pred_fallthru
      _
    // Predicated region
    $region18: #{generator_forward.1} parent=1 // pred_check
      _
    $region19: #{generator_forward.1} parent=1 // pred_check_branch
      %46 = sbr.rel (0) target = $region21
    $region20: #{generator_forward.1} parent=1 // pred_region
      _
    $region21: #{generator_forward.1} parent=1 // pred_fallthru
      _
    // Predicated region
    $region22: #{generator_forward.1} parent=1 // pred_check
      _
    $region23: #{generator_forward.1} parent=1 // pred_check_branch
      %48 = sbr.rel (0) target = $region25
    $region24: #{generator_forward.1} parent=1 // pred_region
      %s50 = ssub.s32 1024, 1024
      %51 = vsyncadd [#allocation5], %s50
      %s52 = sshll.u32 [#allocation6], 4
      %s53 = int_to_ptr.vmem [resolvable:$true] %s52
      %58 = dma.hbm_to_vmem [thread:$0]  %s5, 1024, %s53, [#allocation5], 64, 64, 4
    $region25: #{generator_forward.1} parent=1 // pred_fallthru
      _
    // Predicated region
    $region26: #{generator_forward.1} parent=1 // pred_check
      _
    $region27: #{generator_forward.1} parent=1 // pred_check_branch
      %60 = sbr.rel (0) target = $region29
    $region28: #{generator_forward.1} parent=1 // pred_region
      _
    $region29: #{generator_forward.1} parent=1 // pred_fallthru
      _
    // Predicated region
    $region30: #{generator_forward.1} parent=1 // pred_check
      _
    $region31: #{generator_forward.1} parent=1 // pred_check_branch
      %62 = sbr.rel (0) target = $region33
    $region32: #{generator_forward.1} parent=1 // pred_region
      %s64 = ssub.s32 1024, 1024
      %65 = vsyncadd [#allocation8], %s64
      %s66 = sshll.u32 [#allocation7], 4
      %s67 = int_to_ptr.vmem [resolvable:$true] %s66
      %72 = dma.hbm_to_vmem [thread:$0]  %s7, 1024, %s67, [#allocation8], 64, 64, 4
    $region33: #{generator_forward.1} parent=1 // pred_fallthru
      _
    // Predicated region
    $region34: #{generator_forward.1} parent=1 // pred_check
      _
    $region35: #{generator_forward.1} parent=1 // pred_check_branch
      %74 = sbr.rel (0) target = $region37
    $region36: #{generator_forward.1} parent=1 // pred_region
      _
    $region37: #{generator_forward.1} parent=1 // pred_fallthru
      _
    // Predicated region
    $region38: #{generator_forward.1} parent=1 // pred_check
      _
    $region39: #{generator_forward.1} parent=1 // pred_check_branch
      %76 = sbr.rel (0) target = $region41
    $region40: #{generator_forward.1} parent=1 // pred_region
      %77 = dma.done [#allocation3], 1024
    $region41: #{generator_forward.1} parent=1 // pred_fallthru
      _
    // Predicated region
    $region42: #{generator_forward.1} parent=1 // pred_check
      _
    $region43: #{generator_forward.1} parent=1 // pred_check_branch
      %79 = sbr.rel (0) target = $region45
    $region44: #{generator_forward.1} parent=1 // pred_region
      %80 = dma.done [#allocation5], 1024
    $region45: #{generator_forward.1} parent=1 // pred_fallthru
      _
    // Predicated region
    $region46: #{generator_forward.1} parent=1 // pred_check
      _
    $region47: #{generator_forward.1} parent=1 // pred_check_branch
      %82 = sbr.rel (0) target = $region49
    $region48: #{generator_forward.1} parent=1 // pred_region
      %83 = dma.done [#allocation5], 1024
    $region49: #{generator_forward.1} parent=1 // pred_fallthru
      _
    // Predicated region
    $region50: #{generator_forward.1} parent=1 // pred_check
      _
    $region51: #{generator_forward.1} parent=1 // pred_check_branch
      %85 = sbr.rel (0) target = $region53
    $region52: #{generator_forward.1} parent=1 // pred_region
      %86 = dma.done [#allocation8], 1024
    $region53: #{generator_forward.1} parent=1 // pred_fallthru
      _
    %v88 = vld [vmem:[%s0] sm:$0xf]
    %v89 = vld [vmem:[#allocation2] sm:$0xf]
    %v90 = vld [vmem:[#allocation2 + $0x4] sm:$0xf]
    %v91 = vld [vmem:[#allocation2 + $0x8] sm:$0xf]
    %v92 = vld [vmem:[#allocation2 + $0xc] sm:$0xf]
    %v93 = vld [vmem:[#allocation2 + $0x10] sm:$0xf]
    %v94 = vld [vmem:[#allocation2 + $0x14] sm:$0xf]
    %v95 = vld [vmem:[#allocation2 + $0x18] sm:$0xf]
    %v96 = vld [vmem:[#allocation2 + $0x1c] sm:$0xf]
    %v97 = vld [vmem:[#allocation2 + $0x20] sm:$0xf]
    %v98 = vld [vmem:[#allocation2 + $0x24] sm:$0xf]
    %v99 = vld [vmem:[#allocation2 + $0x28] sm:$0xf]
    %v100 = vld [vmem:[#allocation2 + $0x2c] sm:$0xf]
    %v101 = vld [vmem:[#allocation2 + $0x30] sm:$0xf]
    %v102 = vld [vmem:[#allocation2 + $0x34] sm:$0xf]
    %v103 = vld [vmem:[#allocation2 + $0x38] sm:$0xf]
    %v104 = vld [vmem:[#allocation2 + $0x3c] sm:$0xf]
    %v105 = vld [vmem:[%s2] sm:$0x1]
    %v107 = vlaneseq
    %v108 = vshrl.u32 %v107, 7
    %v109 = vsub.s32 0, %v108
    %v110 = vrot.slane %v105, %v109
    %v128 = vunpack.c.l.b16 %v89
    %v129 = vunpack.c.l.b16 %v90
    %v130 = vunpack.c.l.b16 %v91
    %v131 = vunpack.c.l.b16 %v92
    %v132 = vunpack.c.l.b16 %v93
    %v133 = vunpack.c.l.b16 %v94
    %v134 = vunpack.c.l.b16 %v95
    %v135 = vunpack.c.l.b16 %v96
    %v136 = vunpack.c.l.b16 %v97
    %v137 = vunpack.c.l.b16 %v98
    %v138 = vunpack.c.l.b16 %v99
    %v139 = vunpack.c.l.b16 %v100
    %v140 = vunpack.c.l.b16 %v101
    %v141 = vunpack.c.l.b16 %v102
    %v142 = vunpack.c.l.b16 %v103
    %v143 = vunpack.c.l.b16 %v104
    %v144 = vpack.c.b16 %v129, %v128
    %v145 = vpack.c.b16 %v131, %v130
    %v146 = vpack.c.b16 %v133, %v132
    %v147 = vpack.c.b16 %v135, %v134
    %v148 = vpack.c.b16 %v137, %v136
    %v149 = vpack.c.b16 %v139, %v138
    %v150 = vpack.c.b16 %v141, %v140
    %v151 = vpack.c.b16 %v143, %v142
    %160 = vmatprep.subr.bf16.mxu0 0
    %161 = vmatpush1.bf16.msra.mxu0 %v144
    %162 = vmatprep.subr.bf16.mxu0 0
    %163 = vmatpush1.bf16.msra.mxu0 %v145
    %164 = vmatprep.subr.bf16.mxu0 0
    %165 = vmatpush1.bf16.msra.mxu0 %v146
    %166 = vmatprep.subr.bf16.mxu0 0
    %167 = vmatpush1.bf16.msra.mxu0 %v147
    %168 = vmatprep.subr.bf16.mxu0 0
    %169 = vmatpush1.bf16.msra.mxu0 %v148
    %170 = vmatprep.subr.bf16.mxu0 0
    %171 = vmatpush1.bf16.msra.mxu0 %v149
    %172 = vmatprep.subr.bf16.mxu0 0
    %173 = vmatpush1.bf16.msra.mxu0 %v150
    %174 = vmatprep.subr.bf16.mxu0 0
    %175 = vmatpush1.bf16.msra.mxu0 %v151
    %176 = vmatprep.subr.bf16.mxu0 0
    %177 = vmatpush1.bf16.msra.mxu0 0
    %178 = vmatprep.subr.bf16.mxu0 0
    %179 = vmatpush1.bf16.msra.mxu0 0
    %180 = vmatprep.subr.bf16.mxu0 0
    %181 = vmatpush1.bf16.msra.mxu0 0
    %182 = vmatprep.subr.bf16.mxu0 0
    %183 = vmatpush1.bf16.msra.mxu0 0
    %184 = vmatprep.subr.bf16.mxu0 0
    %185 = vmatpush1.bf16.msra.mxu0 0
    %186 = vmatprep.subr.bf16.mxu0 0
    %187 = vmatpush1.bf16.msra.mxu0 0
    %188 = vmatprep.subr.bf16.mxu0 0
    %189 = vmatpush1.bf16.msra.mxu0 0
    %190 = vmatprep.subr.bf16.mxu0 0
    %191 = vmatpush1.bf16.msra.mxu0 0
    %192 = vmatprep.mubr.bf16.mxu0 0
    %193 = vmatmul.mubr.bf16.gmra.mrb[0].mxu0 %v88
    %v194 = vpop.f32.mrb[0].mxu0
    %v195 = vadd.f32 %v110, %v194
    %v196 = vpop.f32.mrb[0].mxu0
    %v197 = vpop.f32.mrb[0].mxu0
    %v198 = vpop.f32.mrb[0].mxu0
    %199 = vdwg.mxu0
    %v200 = vmul.f32 %v195, 0.2
    %v201 = vmax.f32 %v195, %v200
    %v202 = vpack.c.bf16 %v201, %v201
    %v203 = vld [vmem:[#allocation4] sm:$0xf]
    %v204 = vld [vmem:[#allocation4 + $0x4] sm:$0xf]
    %v205 = vld [vmem:[#allocation4 + $0x8] sm:$0xf]
    %v206 = vld [vmem:[#allocation4 + $0xc] sm:$0xf]
    %v207 = vld [vmem:[#allocation4 + $0x10] sm:$0xf]
    %v208 = vld [vmem:[#allocation4 + $0x14] sm:$0xf]
    %v209 = vld [vmem:[#allocation4 + $0x18] sm:$0xf]
    %v210 = vld [vmem:[#allocation4 + $0x1c] sm:$0xf]
    %v211 = vld [vmem:[#allocation4 + $0x20] sm:$0xf]
    %v212 = vld [vmem:[#allocation4 + $0x24] sm:$0xf]
    %v213 = vld [vmem:[#allocation4 + $0x28] sm:$0xf]
    %v214 = vld [vmem:[#allocation4 + $0x2c] sm:$0xf]
    %v215 = vld [vmem:[#allocation4 + $0x30] sm:$0xf]
    %v216 = vld [vmem:[#allocation4 + $0x34] sm:$0xf]
    %v217 = vld [vmem:[#allocation4 + $0x38] sm:$0xf]
    %v218 = vld [vmem:[#allocation4 + $0x3c] sm:$0xf]
    %v219 = vld [vmem:[%s4] sm:$0x1]
    %v221 = vlaneseq
    %v222 = vshrl.u32 %v221, 7
    %v223 = vsub.s32 0, %v222
    %v224 = vrot.slane %v219, %v223
    %v242 = vunpack.c.l.b16 %v203
    %v243 = vunpack.c.l.b16 %v204
    %v244 = vunpack.c.l.b16 %v205
    %v245 = vunpack.c.l.b16 %v206
    %v246 = vunpack.c.l.b16 %v207
    %v247 = vunpack.c.l.b16 %v208
    %v248 = vunpack.c.l.b16 %v209
    %v249 = vunpack.c.l.b16 %v210
    %v250 = vunpack.c.l.b16 %v211
    %v251 = vunpack.c.l.b16 %v212
    %v252 = vunpack.c.l.b16 %v213
    %v253 = vunpack.c.l.b16 %v214
    %v254 = vunpack.c.l.b16 %v215
    %v255 = vunpack.c.l.b16 %v216
    %v256 = vunpack.c.l.b16 %v217
    %v257 = vunpack.c.l.b16 %v218
    %v258 = vpack.c.b16 %v243, %v242
    %v259 = vpack.c.b16 %v245, %v244
    %v260 = vpack.c.b16 %v247, %v246
    %v261 = vpack.c.b16 %v249, %v248
    %v262 = vpack.c.b16 %v251, %v250
    %v263 = vpack.c.b16 %v253, %v252
    %v264 = vpack.c.b16 %v255, %v254
    %v265 = vpack.c.b16 %v257, %v256
    %274 = vmatprep.subr.bf16.mxu0 0
    %275 = vmatpush1.bf16.msra.mxu0 %v258
    %276 = vmatprep.subr.bf16.mxu0 0
    %277 = vmatpush1.bf16.msra.mxu0 %v259
    %278 = vmatprep.subr.bf16.mxu0 0
    %279 = vmatpush1.bf16.msra.mxu0 %v260
    %280 = vmatprep.subr.bf16.mxu0 0
    %281 = vmatpush1.bf16.msra.mxu0 %v261
    %282 = vmatprep.subr.bf16.mxu0 0
    %283 = vmatpush1.bf16.msra.mxu0 %v262
    %284 = vmatprep.subr.bf16.mxu0 0
    %285 = vmatpush1.bf16.msra.mxu0 %v263
    %286 = vmatprep.subr.bf16.mxu0 0
    %287 = vmatpush1.bf16.msra.mxu0 %v264
    %288 = vmatprep.subr.bf16.mxu0 0
    %289 = vmatpush1.bf16.msra.mxu0 %v265
    %290 = vmatprep.subr.bf16.mxu0 0
    %291 = vmatpush1.bf16.msra.mxu0 0
    %292 = vmatprep.subr.bf16.mxu0 0
    %293 = vmatpush1.bf16.msra.mxu0 0
    %294 = vmatprep.subr.bf16.mxu0 0
    %295 = vmatpush1.bf16.msra.mxu0 0
    %296 = vmatprep.subr.bf16.mxu0 0
    %297 = vmatpush1.bf16.msra.mxu0 0
    %298 = vmatprep.subr.bf16.mxu0 0
    %299 = vmatpush1.bf16.msra.mxu0 0
    %300 = vmatprep.subr.bf16.mxu0 0
    %301 = vmatpush1.bf16.msra.mxu0 0
    %302 = vmatprep.subr.bf16.mxu0 0
    %303 = vmatpush1.bf16.msra.mxu0 0
    %304 = vmatprep.subr.bf16.mxu0 0
    %305 = vmatpush1.bf16.msra.mxu0 0
    %306 = vmatprep.mubr.bf16.mxu0 0
    %307 = vmatmul.mubr.bf16.gmra.mrb[0].mxu0 %v202
    %v308 = vpop.f32.mrb[0].mxu0
    %v309 = vadd.f32 %v224, %v308
    %v310 = vpop.f32.mrb[0].mxu0
    %v311 = vpop.f32.mrb[0].mxu0
    %v312 = vpop.f32.mrb[0].mxu0
    %313 = vdwg.mxu0
    %v314 = vmul.f32 %v309, 0.2
    %v315 = vmax.f32 %v309, %v314
    %v316 = vpack.c.bf16 %v315, %v315
    %v317 = vld [vmem:[#allocation6] sm:$0xf]
    %v318 = vld [vmem:[#allocation6 + $0x4] sm:$0xf]
    %v319 = vld [vmem:[#allocation6 + $0x8] sm:$0xf]
    %v320 = vld [vmem:[#allocation6 + $0xc] sm:$0xf]
    %v321 = vld [vmem:[#allocation6 + $0x10] sm:$0xf]
    %v322 = vld [vmem:[#allocation6 + $0x14] sm:$0xf]
    %v323 = vld [vmem:[#allocation6 + $0x18] sm:$0xf]
    %v324 = vld [vmem:[#allocation6 + $0x1c] sm:$0xf]
    %v325 = vld [vmem:[#allocation6 + $0x20] sm:$0xf]
    %v326 = vld [vmem:[#allocation6 + $0x24] sm:$0xf]
    %v327 = vld [vmem:[#allocation6 + $0x28] sm:$0xf]
    %v328 = vld [vmem:[#allocation6 + $0x2c] sm:$0xf]
    %v329 = vld [vmem:[#allocation6 + $0x30] sm:$0xf]
    %v330 = vld [vmem:[#allocation6 + $0x34] sm:$0xf]
    %v331 = vld [vmem:[#allocation6 + $0x38] sm:$0xf]
    %v332 = vld [vmem:[#allocation6 + $0x3c] sm:$0xf]
    %v333 = vld [vmem:[%s6] sm:$0x1]
    %v335 = vlaneseq
    %v336 = vshrl.u32 %v335, 7
    %v337 = vsub.s32 0, %v336
    %v338 = vrot.slane %v333, %v337
    %v356 = vunpack.c.l.b16 %v317
    %v357 = vunpack.c.l.b16 %v318
    %v358 = vunpack.c.l.b16 %v319
    %v359 = vunpack.c.l.b16 %v320
    %v360 = vunpack.c.l.b16 %v321
    %v361 = vunpack.c.l.b16 %v322
    %v362 = vunpack.c.l.b16 %v323
    %v363 = vunpack.c.l.b16 %v324
    %v364 = vunpack.c.l.b16 %v325
    %v365 = vunpack.c.l.b16 %v326
    %v366 = vunpack.c.l.b16 %v327
    %v367 = vunpack.c.l.b16 %v328
    %v368 = vunpack.c.l.b16 %v329
    %v369 = vunpack.c.l.b16 %v330
    %v370 = vunpack.c.l.b16 %v331
    %v371 = vunpack.c.l.b16 %v332
    %v372 = vpack.c.b16 %v357, %v356
    %v373 = vpack.c.b16 %v359, %v358
    %v374 = vpack.c.b16 %v361, %v360
    %v375 = vpack.c.b16 %v363, %v362
    %v376 = vpack.c.b16 %v365, %v364
    %v377 = vpack.c.b16 %v367, %v366
    %v378 = vpack.c.b16 %v369, %v368
    %v379 = vpack.c.b16 %v371, %v370
    %388 = vmatprep.subr.bf16.mxu0 0
    %389 = vmatpush1.bf16.msra.mxu0 %v372
    %390 = vmatprep.subr.bf16.mxu0 0
    %391 = vmatpush1.bf16.msra.mxu0 %v373
    %392 = vmatprep.subr.bf16.mxu0 0
    %393 = vmatpush1.bf16.msra.mxu0 %v374
    %394 = vmatprep.subr.bf16.mxu0 0
    %395 = vmatpush1.bf16.msra.mxu0 %v375
    %396 = vmatprep.subr.bf16.mxu0 0
    %397 = vmatpush1.bf16.msra.mxu0 %v376
    %398 = vmatprep.subr.bf16.mxu0 0
    %399 = vmatpush1.bf16.msra.mxu0 %v377
    %400 = vmatprep.subr.bf16.mxu0 0
    %401 = vmatpush1.bf16.msra.mxu0 %v378
    %402 = vmatprep.subr.bf16.mxu0 0
    %403 = vmatpush1.bf16.msra.mxu0 %v379
    %404 = vmatprep.subr.bf16.mxu0 0
    %405 = vmatpush1.bf16.msra.mxu0 0
    %406 = vmatprep.subr.bf16.mxu0 0
    %407 = vmatpush1.bf16.msra.mxu0 0
    %408 = vmatprep.subr.bf16.mxu0 0
    %409 = vmatpush1.bf16.msra.mxu0 0
    %410 = vmatprep.subr.bf16.mxu0 0
    %411 = vmatpush1.bf16.msra.mxu0 0
    %412 = vmatprep.subr.bf16.mxu0 0
    %413 = vmatpush1.bf16.msra.mxu0 0
    %414 = vmatprep.subr.bf16.mxu0 0
    %415 = vmatpush1.bf16.msra.mxu0 0
    %416 = vmatprep.subr.bf16.mxu0 0
    %417 = vmatpush1.bf16.msra.mxu0 0
    %418 = vmatprep.subr.bf16.mxu0 0
    %419 = vmatpush1.bf16.msra.mxu0 0
    %420 = vmatprep.mubr.bf16.mxu0 0
    %421 = vmatmul.mubr.bf16.gmra.mrb[0].mxu0 %v316
    %v422 = vpop.f32.mrb[0].mxu0
    %v423 = vadd.f32 %v338, %v422
    %v424 = vpop.f32.mrb[0].mxu0
    %v425 = vpop.f32.mrb[0].mxu0
    %v426 = vpop.f32.mrb[0].mxu0
    %427 = vdwg.mxu0
    %v428 = vmul.f32 %v423, 0.2
    %v429 = vmax.f32 %v423, %v428
    %v430 = vpack.c.bf16 %v429, %v429
    %v431 = vld [vmem:[#allocation7] sm:$0xf]
    %v432 = vld [vmem:[#allocation7 + $0x4] sm:$0xf]
    %v433 = vld [vmem:[#allocation7 + $0x8] sm:$0xf]
    %v434 = vld [vmem:[#allocation7 + $0xc] sm:$0xf]
    %v435 = vld [vmem:[#allocation7 + $0x10] sm:$0xf]
    %v436 = vld [vmem:[#allocation7 + $0x14] sm:$0xf]
    %v437 = vld [vmem:[#allocation7 + $0x18] sm:$0xf]
    %v438 = vld [vmem:[#allocation7 + $0x1c] sm:$0xf]
    %v439 = vld [vmem:[#allocation7 + $0x20] sm:$0xf]
    %v440 = vld [vmem:[#allocation7 + $0x24] sm:$0xf]
    %v441 = vld [vmem:[#allocation7 + $0x28] sm:$0xf]
    %v442 = vld [vmem:[#allocation7 + $0x2c] sm:$0xf]
    %v443 = vld [vmem:[#allocation7 + $0x30] sm:$0xf]
    %v444 = vld [vmem:[#allocation7 + $0x34] sm:$0xf]
    %v445 = vld [vmem:[#allocation7 + $0x38] sm:$0xf]
    %v446 = vld [vmem:[#allocation7 + $0x3c] sm:$0xf]
    %v447 = vld [vmem:[%s8] sm:$0x1]
    %v449 = vlaneseq
    %v450 = vshrl.u32 %v449, 7
    %v451 = vsub.s32 0, %v450
    %v452 = vrot.slane %v447, %v451
    %v470 = vunpack.c.l.b16 %v431
    %v471 = vunpack.c.l.b16 %v432
    %v472 = vunpack.c.l.b16 %v433
    %v473 = vunpack.c.l.b16 %v434
    %v474 = vunpack.c.l.b16 %v435
    %v475 = vunpack.c.l.b16 %v436
    %v476 = vunpack.c.l.b16 %v437
    %v477 = vunpack.c.l.b16 %v438
    %v478 = vunpack.c.l.b16 %v439
    %v479 = vunpack.c.l.b16 %v440
    %v480 = vunpack.c.l.b16 %v441
    %v481 = vunpack.c.l.b16 %v442
    %v482 = vunpack.c.l.b16 %v443
    %v483 = vunpack.c.l.b16 %v444
    %v484 = vunpack.c.l.b16 %v445
    %v485 = vunpack.c.l.b16 %v446
    %v486 = vpack.c.b16 %v471, %v470
    %v487 = vpack.c.b16 %v473, %v472
    %v488 = vpack.c.b16 %v475, %v474
    %v489 = vpack.c.b16 %v477, %v476
    %v490 = vpack.c.b16 %v479, %v478
    %v491 = vpack.c.b16 %v481, %v480
    %v492 = vpack.c.b16 %v483, %v482
    %v493 = vpack.c.b16 %v485, %v484
    %502 = vmatprep.subr.bf16.mxu0 0
    %503 = vmatpush1.bf16.msra.mxu0 %v486
    %504 = vmatprep.subr.bf16.mxu0 0
    %505 = vmatpush1.bf16.msra.mxu0 %v487
    %506 = vmatprep.subr.bf16.mxu0 0
    %507 = vmatpush1.bf16.msra.mxu0 %v488
    %508 = vmatprep.subr.bf16.mxu0 0
    %509 = vmatpush1.bf16.msra.mxu0 %v489
    %510 = vmatprep.subr.bf16.mxu0 0
    %511 = vmatpush1.bf16.msra.mxu0 %v490
    %512 = vmatprep.subr.bf16.mxu0 0
    %513 = vmatpush1.bf16.msra.mxu0 %v491
    %514 = vmatprep.subr.bf16.mxu0 0
    %515 = vmatpush1.bf16.msra.mxu0 %v492
    %516 = vmatprep.subr.bf16.mxu0 0
    %517 = vmatpush1.bf16.msra.mxu0 %v493
    %518 = vmatprep.subr.bf16.mxu0 0
    %519 = vmatpush1.bf16.msra.mxu0 0
    %520 = vmatprep.subr.bf16.mxu0 0
    %521 = vmatpush1.bf16.msra.mxu0 0
    %522 = vmatprep.subr.bf16.mxu0 0
    %523 = vmatpush1.bf16.msra.mxu0 0
    %524 = vmatprep.subr.bf16.mxu0 0
    %525 = vmatpush1.bf16.msra.mxu0 0
    %526 = vmatprep.subr.bf16.mxu0 0
    %527 = vmatpush1.bf16.msra.mxu0 0
    %528 = vmatprep.subr.bf16.mxu0 0
    %529 = vmatpush1.bf16.msra.mxu0 0
    %530 = vmatprep.subr.bf16.mxu0 0
    %531 = vmatpush1.bf16.msra.mxu0 0
    %532 = vmatprep.subr.bf16.mxu0 0
    %533 = vmatpush1.bf16.msra.mxu0 0
    %534 = vmatprep.mubr.bf16.mxu0 0
    %535 = vmatmul.mubr.bf16.gmra.mrb[0].mxu0 %v430
    %v536 = vpop.f32.mrb[0].mxu0
    %v537 = vadd.f32 %v452, %v536
    %v538 = vpop.f32.mrb[0].mxu0
    %v539 = vpop.f32.mrb[0].mxu0
    %v540 = vpop.f32.mrb[0].mxu0
    %541 = vdwg.mxu0
    %v542 = vtanh.pop %v537
    %v543 = vpack.c.bf16 %v542, %v542
    %544 = vst [vmem:[%s9] sm:$0xf] %v543
    // Predicated region
    $region54: #{generator_forward.1} parent=1 // pred_check
      _
    $region55: #{generator_forward.1} parent=1 // pred_check_branch
      %546 = sbr.rel (0) target = $region57
    $region56: #{generator_forward.1} parent=1 // pred_region
      _
    $region57: #{generator_forward.1} parent=1 // pred_fallthru
      _
    // Predicated region
    $region58: #{generator_forward.1} parent=1 // pred_check
      _
    $region59: #{generator_forward.1} parent=1 // pred_check_branch
      %548 = sbr.rel (0) target = $region61
    $region60: #{generator_forward.1} parent=1 // pred_region
      _
    $region61: #{generator_forward.1} parent=1 // pred_fallthru
      _
    %549 = vsyncpa [#allocation3], 1
    %550 = vsyncpa [#allocation5], 1
    %551 = vsyncpa [#allocation8], 1

</llo_original>
